<compile_context>
chip_gen: v5e
topology: v5e:2x2
jax: 0.10.0
libtpu: 0.0.40
codegen_flags: <defaults>
</compile_context>

<pallas_src>
import functools

import jax
import jax.numpy as jnp
from jax import lax
from jax.experimental import pallas as pl
from jax.experimental.pallas import tpu as pltpu


def _siglip_attention_kernel(x_q_ref, x_kv_ref, wq_ref, bq_ref, wkv_ref,
                             bkv_ref, wo_ref, bo_ref, out_ref, *rest,
                             num_heads_per_group, head_dim, with_weights):
    if with_weights:
        attnw_ref, acc_ref = rest
    else:
        attnw_ref = None
        (acc_ref,) = rest

    G = num_heads_per_group
    d = head_dim
    Gd = G * d
    g = pl.program_id(2)                     # head-group index (innermost axis)
    act = out_ref.dtype

    x_q = x_q_ref[...]                       # (tq, E)
    x_kv = x_kv_ref[...]                     # (S,  E)

    # Fused per-group projections (MXU, f32 accumulation).  Softmax scale was
    # folded into wq/bq in the wrapper.  Results are rounded to the activation
    # dtype before the score / PV matmuls (bf16-native MXU; matches the
    # reference, which rounds q/k/v after each Linear).
    q_all = (jnp.dot(x_q, wq_ref[g], preferred_element_type=jnp.float32)
             + bq_ref[g]).astype(act)                             # (tq, G*d)
    kv_all = (jnp.dot(x_kv, wkv_ref[g], preferred_element_type=jnp.float32)
              + bkv_ref[g]).astype(act)                           # (S, 2*G*d)

    ctxs = []
    for i in range(G):                       # static, small (G <= ~4 real shapes)
        q_i = q_all[:, i * d:(i + 1) * d]                         # (tq, d)
        k_i = kv_all[:, i * d:(i + 1) * d]                        # (S,  d)
        v_i = kv_all[:, Gd + i * d:Gd + (i + 1) * d]              # (S,  d)

        # q @ k^T via dot_general (no explicit transpose op).
        s = lax.dot_general(q_i, k_i, (((1,), (1,)), ((), ())),
                            preferred_element_type=jnp.float32)   # (tq, S)

        # Softmax in f32.
        s = s - jnp.max(s, axis=-1, keepdims=True)
        e = jnp.exp(s)
        denom = jnp.sum(e, axis=-1, keepdims=True)
        if with_weights:
            # Exact divide so the *returned* rows sum to 1 (parity with torch).
            p = e / denom
            attnw_ref[i] = p.astype(attnw_ref.dtype)              # (tq, S) slab
        else:
            p = e * pl.reciprocal(denom, approx=True)             # EUP slot

        # TODO(synk): attention dropout skipped (p=0.0 / eval mode => identity).
        ctxs.append(jnp.dot(p.astype(act), v_i,
                            preferred_element_type=jnp.float32).astype(act))

    ctx = ctxs[0] if G == 1 else jnp.concatenate(ctxs, axis=-1)   # (tq, G*d)

    # Group slice of the output projection: K = G*d (full MXU fill).
    part = jnp.dot(ctx, wo_ref[g], preferred_element_type=jnp.float32)  # (tq, E)

    @pl.when(g == 0)
    def _():
        # Fold the output bias into the accumulator init (drops the final add).
        acc_ref[...] = jnp.broadcast_to(bo_ref[...], acc_ref.shape)

    acc_ref[...] += part

    @pl.when(g == pl.num_programs(2) - 1)
    def _():
        out_ref[...] = acc_ref[...].astype(out_ref.dtype)


def _largest_divisor_leq(n, target):
    best = 1
    for cand in range(1, n + 1):
        if n % cand == 0 and cand <= target:
            best = cand
    return best


def siglip_attention(hidden_states, params, num_heads, *,
                     return_attn_weights=False, block_q=None,
                     vmem_limit_bytes=None):
    """Pallas SiglipAttention forward.

    hidden_states: (B, S, E)
    params: q/k/v/out weights of shape (E, E) (PyTorch (out, in) layout),
            biases of shape (E,).
    block_q: optional query-tile size (parallel grid axis; must divide S and be
             a multiple of 8).  Recommended on v7x for large S; note K/V are
             recomputed per query tile.
    vmem_limit_bytes: scoped-VMEM limit.  Default 48 MiB (safe on v5e/v6e/v7x).
    returns (attn_output (B, S, E), attn_weights (B, H, S, S) or None)
    """
    B, S, E = hidden_states.shape
    H = num_heads
    assert E % H == 0
    d = E // H
    scale = d ** (-0.5)
    dtype = hidden_states.dtype
    itemsize = jnp.dtype(dtype).itemsize

    # Head grouping: pick G so the grouped width ~ fills the 256-wide MXU.
    G = _largest_divisor_leq(H, max(1, -(-256 // d)))
    Hg = H // G
    Gd = G * d

    # Query tiling (optional, parallel axis).
    if block_q is not None and 0 < block_q < S and S % block_q == 0 \
            and block_q % 8 == 0:
        tq = block_q
    else:
        tq = S
    n_q = S // tq

    # ---- Weight preparation (one-time, outside the kernel) -----------------
    # PyTorch nn.Linear: y = x @ W.T + b, W is (out, in).  Output columns are
    # head-major, so reshaping splits cleanly into head groups.
    def group_in(w):                      # (E_out, E_in) -> (Hg, E_in, G*d)
        return w.T.reshape(E, Hg, Gd).transpose(1, 0, 2)

    f32 = jnp.float32
    wq = group_in((params["q_w"].astype(f32) * scale).astype(params["q_w"].dtype))
    wk = group_in(params["k_w"])
    wv = group_in(params["v_w"])
    wkv = jnp.concatenate([wk, wv], axis=-1)                    # (Hg, E, 2*G*d)

    bq = (params["q_b"].astype(f32) * scale).reshape(Hg, 1, Gd)
    bk = params["k_b"].astype(f32).reshape(Hg, 1, Gd)
    bv = params["v_b"].astype(f32).reshape(Hg, 1, Gd)
    bkv = jnp.concatenate([bk, bv], axis=-1)                    # (Hg, 1, 2*G*d)

    wo = params["o_w"].T.reshape(Hg, Gd, E)                     # (Hg, G*d, E)
    bo = params["o_b"].astype(f32).reshape(1, E)

    # ---- BlockSpecs ----------------------------------------------------------
    # Weights use full-array blocks with constant index_maps -> DMA'd once and
    # VMEM-resident for the whole call (no per-batch re-streaming).
    # TODO(synk): pipeline_mode=pl.Buffered(1) on the weight specs would halve
    # their VMEM footprint (block never changes); left off for portability.
    x_q_spec = pl.BlockSpec((pl.Squeezed(), tq, E), lambda b, qi, g: (b, qi, 0))
    x_kv_spec = pl.BlockSpec((pl.Squeezed(), S, E), lambda b, qi, g: (b, 0, 0))
    wq_spec = pl.BlockSpec((Hg, E, Gd), lambda b, qi, g: (0, 0, 0))
    bq_spec = pl.BlockSpec((Hg, 1, Gd), lambda b, qi, g: (0, 0, 0))
    wkv_spec = pl.BlockSpec((Hg, E, 2 * Gd), lambda b, qi, g: (0, 0, 0))
    bkv_spec = pl.BlockSpec((Hg, 1, 2 * Gd), lambda b, qi, g: (0, 0, 0))
    wo_spec = pl.BlockSpec((Hg, Gd, E), lambda b, qi, g: (0, 0, 0))
    bo_spec = pl.BlockSpec((1, E), lambda b, qi, g: (0, 0))
    out_spec = pl.BlockSpec((pl.Squeezed(), tq, E), lambda b, qi, g: (b, qi, 0))

    if return_attn_weights:
        attnw_spec = pl.BlockSpec((pl.Squeezed(), G, tq, S),
                                  lambda b, qi, g: (b, g, qi, 0))
        out_shape = (jax.ShapeDtypeStruct((B, S, E), dtype),
                     jax.ShapeDtypeStruct((B, H, S, S), dtype))
        out_specs = (out_spec, attnw_spec)
    else:
        out_shape = jax.ShapeDtypeStruct((B, S, E), dtype)
        out_specs = out_spec

    kernel = functools.partial(_siglip_attention_kernel,
                               num_heads_per_group=G, head_dim=d,
                               with_weights=return_attn_weights)

    # Advisory cost estimate for XLA scheduling around the custom call.
    flops = int(B * n_q * Hg * (2 * tq * E * Gd            # Q projection
                                + 2 * S * E * 2 * Gd       # K/V projection
                                + G * 4 * tq * S * d       # scores + PV
                                + 2 * tq * Gd * E))        # out-proj slice
    transcendentals = int(B * H * S * S)
    bytes_accessed = int(
        B * (1 + Hg) * S * E * itemsize                    # x (q + kv views) in
        + B * S * E * itemsize                             # out
        + (4 * E * E + 4 * E) * itemsize                   # weights, once
        + (B * H * S * S * itemsize if return_attn_weights else 0))
    cost = pl.CostEstimate(flops=flops, transcendentals=transcendentals,
                           bytes_accessed=bytes_accessed)

    if vmem_limit_bytes is None:
        # Above every chip's default scoped limit, below v7x's 64 MiB physical.
        vmem_limit_bytes = 48 * 1024 * 1024

    result = pl.pallas_call(
        kernel,
        out_shape=out_shape,
        grid_spec=pltpu.PrefetchScalarGridSpec(
            num_scalar_prefetch=0,
            grid=(B, n_q, Hg),                 # head-group axis innermost
            in_specs=[x_q_spec, x_kv_spec,
                      wq_spec, bq_spec,
                      wkv_spec, bkv_spec,
                      wo_spec, bo_spec],
            out_specs=out_specs,
            scratch_shapes=[pltpu.VMEM((tq, E), jnp.float32)]),
        compiler_params=pltpu.CompilerParams(
            dimension_semantics=("parallel", "parallel", "arbitrary"),
            vmem_limit_bytes=int(vmem_limit_bytes)),
        cost_estimate=cost,
    )(hidden_states, hidden_states, wq, bq, wkv, bkv, wo, bo)

    if return_attn_weights:
        attn_out, attn_weights = result
        return attn_out, attn_weights
    return result, None


def _reference(hidden_states, params, num_heads):
    """Plain-JAX reference mirroring the PyTorch forward exactly."""
    B, S, E = hidden_states.shape
    d = E // num_heads
    scale = d ** (-0.5)

    def lin(x, w, b):  # PyTorch nn.Linear: x @ W.T + b
        return x @ w.T + b

    q = lin(hidden_states, params["q_w"], params["q_b"])
    k = lin(hidden_states, params["k_w"], params["k_b"])
    v = lin(hidden_states, params["v_w"], params["v_b"])
    q = q.reshape(B, S, num_heads, d).transpose(0, 2, 1, 3)
    k = k.reshape(B, S, num_heads, d).transpose(0, 2, 1, 3)
    v = v.reshape(B, S, num_heads, d).transpose(0, 2, 1, 3)
    w = jnp.einsum("bhqd,bhkd->bhqk", q, k) * scale
    w = jax.nn.softmax(w.astype(jnp.float32), axis=-1).astype(q.dtype)
    o = jnp.einsum("bhqk,bhkd->bhqd", w, v)
    o = o.transpose(0, 2, 1, 3).reshape(B, S, E)
    o = lin(o, params["o_w"], params["o_b"])
    return o, w


if __name__ == "__main__":
    # Config: hidden_size=32, num_attention_heads=4, attention_dropout=0.0
    B, S, E, H = 2, 8, 32, 4

    key = jax.random.PRNGKey(0)
    keys = jax.random.split(key, 9)
    init = lambda k, shape: (0.02 * jax.random.normal(k, shape)).astype(jnp.float32)

    params = {
        "q_w": init(keys[0], (E, E)), "q_b": init(keys[1], (E,)),
        "k_w": init(keys[2], (E, E)), "k_b": init(keys[3], (E,)),
        "v_w": init(keys[4], (E, E)), "v_b": init(keys[5], (E,)),
        "o_w": init(keys[6], (E, E)), "o_b": init(keys[7], (E,)),
    }
    x = jax.random.normal(keys[8], (B, S, E), dtype=jnp.float32)

    ref_out, ref_w = _reference(x, params, num_heads=H)

    # Full path (returns attention weights, like the PyTorch module).
    attn_out, attn_weights = siglip_attention(x, params, num_heads=H,
                                              return_attn_weights=True)
    attn_out = jax.block_until_ready(attn_out)
    attn_weights = jax.block_until_ready(attn_weights)
    assert attn_out.shape == (B, S, E)
    assert attn_weights.shape == (B, H, S, S)
    assert jnp.allclose(attn_out, ref_out, atol=2e-3, rtol=2e-3)
    assert jnp.allclose(attn_weights, ref_w, atol=2e-3, rtol=2e-3)

    # Fast (default) path: skip the (B,H,S,S) attention-weights writeback.
    out_only, no_w = siglip_attention(x, params, num_heads=H)
    out_only = jax.block_until_ready(out_only)
    assert no_w is None
    # Tolerance covers the EUP approximate reciprocal in the fast-path softmax.
    assert jnp.allclose(out_only, ref_out, atol=2e-3, rtol=2e-3)

    print("KERNEL_OK")
</pallas_src>

<mosaic_0001>
module attributes {stable_mosaic.version = 11 : i64} {
  func.func @_siglip_attention_kernel(%arg0: i32, %arg1: i32, %arg2: i32, %arg3: memref<1x8x32xf32, #tpu.memory_space<vmem>>, %arg4: memref<1x8x32xf32, #tpu.memory_space<vmem>>, %arg5: memref<1x32x32xf32, #tpu.memory_space<vmem>>, %arg6: memref<1x1x32xf32, #tpu.memory_space<vmem>>, %arg7: memref<1x32x64xf32, #tpu.memory_space<vmem>>, %arg8: memref<1x1x64xf32, #tpu.memory_space<vmem>>, %arg9: memref<1x32x32xf32, #tpu.memory_space<vmem>>, %arg10: memref<1x32xf32, #tpu.memory_space<vmem>>, %arg11: memref<1x8x32xf32, #tpu.memory_space<vmem>>, %arg12: memref<1x4x8x8xf32, #tpu.memory_space<vmem>>, %arg13: memref<8x32xf32, #tpu.memory_space<vmem>>) attributes {dimension_semantics = [#tpu.dimension_semantics<parallel>, #tpu.dimension_semantics<parallel>, #tpu.dimension_semantics<arbitrary>], iteration_bounds = array<i64: 2, 1, 1>, scalar_prefetch = 0 : i64, scratch_operands = 1 : i64, tpu.core_type = #tpu.core_type<tc>, window_params = [{transform_indices = @transform_0, window_bounds = array<i64: 1, 8, 32>}, {transform_indices = @transform_1, window_bounds = array<i64: 1, 8, 32>}, {pipeline_mode = #tpu.pipeline_mode<synchronous>, transform_indices = @transform_2, window_bounds = array<i64: 1, 32, 32>}, {pipeline_mode = #tpu.pipeline_mode<synchronous>, transform_indices = @transform_3, window_bounds = array<i64: 1, 1, 32>}, {pipeline_mode = #tpu.pipeline_mode<synchronous>, transform_indices = @transform_4, window_bounds = array<i64: 1, 32, 64>}, {pipeline_mode = #tpu.pipeline_mode<synchronous>, transform_indices = @transform_5, window_bounds = array<i64: 1, 1, 64>}, {pipeline_mode = #tpu.pipeline_mode<synchronous>, transform_indices = @transform_6, window_bounds = array<i64: 1, 32, 32>}, {pipeline_mode = #tpu.pipeline_mode<synchronous>, transform_indices = @transform_7, window_bounds = array<i64: 1, 32>}, {transform_indices = @transform_8, window_bounds = array<i64: 1, 8, 32>}, {transform_indices = @transform_9, window_bounds = array<i64: 1, 4, 8, 8>}]} {
    %c0 = arith.constant 0 : index
    %c0_0 = arith.constant 0 : index
    %c0_1 = arith.constant 0 : index
    %0 = vector.load %arg3[%c0, %c0_0, %c0_1] : memref<1x8x32xf32, #tpu.memory_space<vmem>>, vector<1x8x32xf32>
    %1 = vector.shape_cast %0 : vector<1x8x32xf32> to vector<8x32xf32>
    %c0_2 = arith.constant 0 : index
    %c0_3 = arith.constant 0 : index
    %c0_4 = arith.constant 0 : index
    %2 = vector.load %arg4[%c0_2, %c0_3, %c0_4] : memref<1x8x32xf32, #tpu.memory_space<vmem>>, vector<1x8x32xf32>
    %3 = vector.shape_cast %2 : vector<1x8x32xf32> to vector<8x32xf32>
    %4 = arith.index_cast %arg2 : i32 to index
    %c0_5 = arith.constant 0 : index
    %c0_6 = arith.constant 0 : index
    %5 = vector.load %arg5[%4, %c0_5, %c0_6] : memref<1x32x32xf32, #tpu.memory_space<vmem>>, vector<1x32x32xf32>
    %6 = vector.shape_cast %5 : vector<1x32x32xf32> to vector<32x32xf32>
    %cst = arith.constant dense<0.000000e+00> : vector<8x32xf32>
    %7 = tpu.matmul %1, %6, %cst {dimension_numbers = #tpu.dot_dimension_numbers<[1], [0], [0], [1], [0, 0, 1, 1], [], []>} : vector<8x32xf32>, vector<32x32xf32>, vector<8x32xf32> -> vector<8x32xf32>
    %8 = arith.index_cast %arg2 : i32 to index
    %c0_7 = arith.constant 0 : index
    %c0_8 = arith.constant 0 : index
    %9 = vector.load %arg6[%8, %c0_7, %c0_8] : memref<1x1x32xf32, #tpu.memory_space<vmem>>, vector<1x1x32xf32>
    %10 = vector.shape_cast %9 : vector<1x1x32xf32> to vector<1x32xf32>
    %11 = vector.broadcast %10 : vector<1x32xf32> to vector<8x32xf32>
    %12 = arith.addf %7, %11 : vector<8x32xf32>
    %13 = arith.index_cast %arg2 : i32 to index
    %c0_9 = arith.constant 0 : index
    %c0_10 = arith.constant 0 : index
    %14 = vector.load %arg7[%13, %c0_9, %c0_10] : memref<1x32x64xf32, #tpu.memory_space<vmem>>, vector<1x32x64xf32>
    %15 = vector.shape_cast %14 : vector<1x32x64xf32> to vector<32x64xf32>
    %cst_11 = arith.constant dense<0.000000e+00> : vector<8x64xf32>
    %16 = tpu.matmul %3, %15, %cst_11 {dimension_numbers = #tpu.dot_dimension_numbers<[1], [0], [0], [1], [0, 0, 1, 1], [], []>} : vector<8x32xf32>, vector<32x64xf32>, vector<8x64xf32> -> vector<8x64xf32>
    %17 = arith.index_cast %arg2 : i32 to index
    %c0_12 = arith.constant 0 : index
    %c0_13 = arith.constant 0 : index
    %18 = vector.load %arg8[%17, %c0_12, %c0_13] : memref<1x1x64xf32, #tpu.memory_space<vmem>>, vector<1x1x64xf32>
    %19 = vector.shape_cast %18 : vector<1x1x64xf32> to vector<1x64xf32>
    %20 = vector.broadcast %19 : vector<1x64xf32> to vector<8x64xf32>
    %21 = arith.addf %16, %20 : vector<8x64xf32>
    %22 = vector.extract_strided_slice %12 {offsets = [0, 0], sizes = [8, 8], strides = [1, 1]} : vector<8x32xf32> to vector<8x8xf32>
    %23 = vector.extract_strided_slice %21 {offsets = [0, 0], sizes = [8, 8], strides = [1, 1]} : vector<8x64xf32> to vector<8x8xf32>
    %24 = vector.extract_strided_slice %21 {offsets = [0, 32], sizes = [8, 8], strides = [1, 1]} : vector<8x64xf32> to vector<8x8xf32>
    %cst_14 = arith.constant dense<0.000000e+00> : vector<8x8xf32>
    %25 = tpu.matmul %22, %23, %cst_14 {dimension_numbers = #tpu.dot_dimension_numbers<[1], [1], [0], [0], [0, 0, 1, 0], [], []>} : vector<8x8xf32>, vector<8x8xf32>, vector<8x8xf32> -> vector<8x8xf32>
    %cst_15 = arith.constant dense<0xFF800000> : vector<8xf32>
    %26 = vector.multi_reduction <maximumf>, %25, %cst_15 [1] : vector<8x8xf32> to vector<8xf32>
    %27 = vector.shape_cast %26 : vector<8xf32> to vector<8x1xf32>
    %28 = vector.broadcast %27 : vector<8x1xf32> to vector<8x8xf32>
    %29 = arith.subf %25, %28 : vector<8x8xf32>
    %30 = math.exp %29 : vector<8x8xf32>
    %cst_16 = arith.constant dense<0.000000e+00> : vector<8xf32>
    %31 = vector.multi_reduction <add>, %30, %cst_16 [1] : vector<8x8xf32> to vector<8xf32>
    %32 = vector.shape_cast %31 : vector<8xf32> to vector<8x1xf32>
    %33 = vector.broadcast %32 : vector<8x1xf32> to vector<8x8xf32>
    %34 = arith.divf %30, %33 : vector<8x8xf32>
    %c0_17 = arith.constant 0 : index
    %c0_18 = arith.constant 0 : index
    %c0_19 = arith.constant 0 : index
    %c0_20 = arith.constant 0 : index
    %35 = vector.load %arg12[%c0_17, %c0_18, %c0_19, %c0_20] : memref<1x4x8x8xf32, #tpu.memory_space<vmem>>, vector<1x1x8x8xf32>
    %36 = vector.shape_cast %35 : vector<1x1x8x8xf32> to vector<8x8xf32>
    %37 = vector.shape_cast %34 : vector<8x8xf32> to vector<1x1x8x8xf32>
    tpu.vector_store %arg12[%c0_17, %c0_18, %c0_19, %c0_20], %37 {strides = array<i32>} : memref<1x4x8x8xf32, #tpu.memory_space<vmem>>, vector<1x1x8x8xf32>,
    %cst_21 = arith.constant dense<0.000000e+00> : vector<8x8xf32>
    %38 = tpu.matmul %34, %24, %cst_21 {dimension_numbers = #tpu.dot_dimension_numbers<[1], [0], [0], [1], [0, 0, 1, 1], [], []>} : vector<8x8xf32>, vector<8x8xf32>, vector<8x8xf32> -> vector<8x8xf32>
    %39 = vector.extract_strided_slice %12 {offsets = [0, 8], sizes = [8, 8], strides = [1, 1]} : vector<8x32xf32> to vector<8x8xf32>
    %40 = vector.extract_strided_slice %21 {offsets = [0, 8], sizes = [8, 8], strides = [1, 1]} : vector<8x64xf32> to vector<8x8xf32>
    %41 = vector.extract_strided_slice %21 {offsets = [0, 40], sizes = [8, 8], strides = [1, 1]} : vector<8x64xf32> to vector<8x8xf32>
    %cst_22 = arith.constant dense<0.000000e+00> : vector<8x8xf32>
    %42 = tpu.matmul %39, %40, %cst_22 {dimension_numbers = #tpu.dot_dimension_numbers<[1], [1], [0], [0], [0, 0, 1, 0], [], []>} : vector<8x8xf32>, vector<8x8xf32>, vector<8x8xf32> -> vector<8x8xf32>
    %cst_23 = arith.constant dense<0xFF800000> : vector<8xf32>
    %43 = vector.multi_reduction <maximumf>, %42, %cst_23 [1] : vector<8x8xf32> to vector<8xf32>
    %44 = vector.shape_cast %43 : vector<8xf32> to vector<8x1xf32>
    %45 = vector.broadcast %44 : vector<8x1xf32> to vector<8x8xf32>
    %46 = arith.subf %42, %45 : vector<8x8xf32>
    %47 = math.exp %46 : vector<8x8xf32>
    %cst_24 = arith.constant dense<0.000000e+00> : vector<8xf32>
    %48 = vector.multi_reduction <add>, %47, %cst_24 [1] : vector<8x8xf32> to vector<8xf32>
    %49 = vector.shape_cast %48 : vector<8xf32> to vector<8x1xf32>
    %50 = vector.broadcast %49 : vector<8x1xf32> to vector<8x8xf32>
    %51 = arith.divf %47, %50 : vector<8x8xf32>
    %c0_25 = arith.constant 0 : index
    %c1 = arith.constant 1 : index
    %c0_26 = arith.constant 0 : index
    %c0_27 = arith.constant 0 : index
    %52 = vector.load %arg12[%c0_25, %c1, %c0_26, %c0_27] : memref<1x4x8x8xf32, #tpu.memory_space<vmem>>, vector<1x1x8x8xf32>
    %53 = vector.shape_cast %52 : vector<1x1x8x8xf32> to vector<8x8xf32>
    %54 = vector.shape_cast %51 : vector<8x8xf32> to vector<1x1x8x8xf32>
    tpu.vector_store %arg12[%c0_25, %c1, %c0_26, %c0_27], %54 {strides = array<i32>} : memref<1x4x8x8xf32, #tpu.memory_space<vmem>>, vector<1x1x8x8xf32>,
    %cst_28 = arith.constant dense<0.000000e+00> : vector<8x8xf32>
    %55 = tpu.matmul %51, %41, %cst_28 {dimension_numbers = #tpu.dot_dimension_numbers<[1], [0], [0], [1], [0, 0, 1, 1], [], []>} : vector<8x8xf32>, vector<8x8xf32>, vector<8x8xf32> -> vector<8x8xf32>
    %56 = vector.extract_strided_slice %12 {offsets = [0, 16], sizes = [8, 8], strides = [1, 1]} : vector<8x32xf32> to vector<8x8xf32>
    %57 = vector.extract_strided_slice %21 {offsets = [0, 16], sizes = [8, 8], strides = [1, 1]} : vector<8x64xf32> to vector<8x8xf32>
    %58 = vector.extract_strided_slice %21 {offsets = [0, 48], sizes = [8, 8], strides = [1, 1]} : vector<8x64xf32> to vector<8x8xf32>
    %cst_29 = arith.constant dense<0.000000e+00> : vector<8x8xf32>
    %59 = tpu.matmul %56, %57, %cst_29 {dimension_numbers = #tpu.dot_dimension_numbers<[1], [1], [0], [0], [0, 0, 1, 0], [], []>} : vector<8x8xf32>, vector<8x8xf32>, vector<8x8xf32> -> vector<8x8xf32>
    %cst_30 = arith.constant dense<0xFF800000> : vector<8xf32>
    %60 = vector.multi_reduction <maximumf>, %59, %cst_30 [1] : vector<8x8xf32> to vector<8xf32>
    %61 = vector.shape_cast %60 : vector<8xf32> to vector<8x1xf32>
    %62 = vector.broadcast %61 : vector<8x1xf32> to vector<8x8xf32>
    %63 = arith.subf %59, %62 : vector<8x8xf32>
    %64 = math.exp %63 : vector<8x8xf32>
    %cst_31 = arith.constant dense<0.000000e+00> : vector<8xf32>
    %65 = vector.multi_reduction <add>, %64, %cst_31 [1] : vector<8x8xf32> to vector<8xf32>
    %66 = vector.shape_cast %65 : vector<8xf32> to vector<8x1xf32>
    %67 = vector.broadcast %66 : vector<8x1xf32> to vector<8x8xf32>
    %68 = arith.divf %64, %67 : vector<8x8xf32>
    %c0_32 = arith.constant 0 : index
    %c2 = arith.constant 2 : index
    %c0_33 = arith.constant 0 : index
    %c0_34 = arith.constant 0 : index
    %69 = vector.load %arg12[%c0_32, %c2, %c0_33, %c0_34] : memref<1x4x8x8xf32, #tpu.memory_space<vmem>>, vector<1x1x8x8xf32>
    %70 = vector.shape_cast %69 : vector<1x1x8x8xf32> to vector<8x8xf32>
    %71 = vector.shape_cast %68 : vector<8x8xf32> to vector<1x1x8x8xf32>
    tpu.vector_store %arg12[%c0_32, %c2, %c0_33, %c0_34], %71 {strides = array<i32>} : memref<1x4x8x8xf32, #tpu.memory_space<vmem>>, vector<1x1x8x8xf32>,
    %cst_35 = arith.constant dense<0.000000e+00> : vector<8x8xf32>
    %72 = tpu.matmul %68, %58, %cst_35 {dimension_numbers = #tpu.dot_dimension_numbers<[1], [0], [0], [1], [0, 0, 1, 1], [], []>} : vector<8x8xf32>, vector<8x8xf32>, vector<8x8xf32> -> vector<8x8xf32>
    %73 = vector.extract_strided_slice %12 {offsets = [0, 24], sizes = [8, 8], strides = [1, 1]} : vector<8x32xf32> to vector<8x8xf32>
    %74 = vector.extract_strided_slice %21 {offsets = [0, 24], sizes = [8, 8], strides = [1, 1]} : vector<8x64xf32> to vector<8x8xf32>
    %75 = vector.extract_strided_slice %21 {offsets = [0, 56], sizes = [8, 8], strides = [1, 1]} : vector<8x64xf32> to vector<8x8xf32>
    %cst_36 = arith.constant dense<0.000000e+00> : vector<8x8xf32>
    %76 = tpu.matmul %73, %74, %cst_36 {dimension_numbers = #tpu.dot_dimension_numbers<[1], [1], [0], [0], [0, 0, 1, 0], [], []>} : vector<8x8xf32>, vector<8x8xf32>, vector<8x8xf32> -> vector<8x8xf32>
    %cst_37 = arith.constant dense<0xFF800000> : vector<8xf32>
    %77 = vector.multi_reduction <maximumf>, %76, %cst_37 [1] : vector<8x8xf32> to vector<8xf32>
    %78 = vector.shape_cast %77 : vector<8xf32> to vector<8x1xf32>
    %79 = vector.broadcast %78 : vector<8x1xf32> to vector<8x8xf32>
    %80 = arith.subf %76, %79 : vector<8x8xf32>
    %81 = math.exp %80 : vector<8x8xf32>
    %cst_38 = arith.constant dense<0.000000e+00> : vector<8xf32>
    %82 = vector.multi_reduction <add>, %81, %cst_38 [1] : vector<8x8xf32> to vector<8xf32>
    %83 = vector.shape_cast %82 : vector<8xf32> to vector<8x1xf32>
    %84 = vector.broadcast %83 : vector<8x1xf32> to vector<8x8xf32>
    %85 = arith.divf %81, %84 : vector<8x8xf32>
    %c0_39 = arith.constant 0 : index
    %c3 = arith.constant 3 : index
    %c0_40 = arith.constant 0 : index
    %c0_41 = arith.constant 0 : index
    %86 = vector.load %arg12[%c0_39, %c3, %c0_40, %c0_41] : memref<1x4x8x8xf32, #tpu.memory_space<vmem>>, vector<1x1x8x8xf32>
    %87 = vector.shape_cast %86 : vector<1x1x8x8xf32> to vector<8x8xf32>
    %88 = vector.shape_cast %85 : vector<8x8xf32> to vector<1x1x8x8xf32>
    tpu.vector_store %arg12[%c0_39, %c3, %c0_40, %c0_41], %88 {strides = array<i32>} : memref<1x4x8x8xf32, #tpu.memory_space<vmem>>, vector<1x1x8x8xf32>,
    %cst_42 = arith.constant dense<0.000000e+00> : vector<8x8xf32>
    %89 = tpu.matmul %85, %75, %cst_42 {dimension_numbers = #tpu.dot_dimension_numbers<[1], [0], [0], [1], [0, 0, 1, 1], [], []>} : vector<8x8xf32>, vector<8x8xf32>, vector<8x8xf32> -> vector<8x8xf32>
    %90 = tpu.concatenate %38, %55, %72, %89 in 1 : vector<8x8xf32>, vector<8x8xf32>, vector<8x8xf32>, vector<8x8xf32> -> vector<8x32xf32>
    %91 = arith.index_cast %arg2 : i32 to index
    %c0_43 = arith.constant 0 : index
    %c0_44 = arith.constant 0 : index
    %92 = vector.load %arg9[%91, %c0_43, %c0_44] : memref<1x32x32xf32, #tpu.memory_space<vmem>>, vector<1x32x32xf32>
    %93 = vector.shape_cast %92 : vector<1x32x32xf32> to vector<32x32xf32>
    %cst_45 = arith.constant dense<0.000000e+00> : vector<8x32xf32>
    %94 = tpu.matmul %90, %93, %cst_45 {dimension_numbers = #tpu.dot_dimension_numbers<[1], [0], [0], [1], [0, 0, 1, 1], [], []>} : vector<8x32xf32>, vector<32x32xf32>, vector<8x32xf32> -> vector<8x32xf32>
    %c0_i32 = arith.constant 0 : i32
    %95 = arith.cmpi eq, %arg2, %c0_i32 : i32
    %96 = arith.extui %95 : i1 to i32
    %c0_i32_46 = arith.constant 0 : i32
    %97 = arith.cmpi ne, %96, %c0_i32_46 : i32
    scf.if %97 {
      %c0_53 = arith.constant 0 : index
      %c0_54 = arith.constant 0 : index
      %104 = vector.load %arg10[%c0_53, %c0_54] : memref<1x32xf32, #tpu.memory_space<vmem>>, vector<1x32xf32>
      %105 = vector.shape_cast %104 : vector<1x32xf32> to vector<1x32xf32>
      %106 = vector.broadcast %105 : vector<1x32xf32> to vector<8x32xf32>
      %c0_55 = arith.constant 0 : index
      %c0_56 = arith.constant 0 : index
      %107 = vector.load %arg13[%c0_55, %c0_56] : memref<8x32xf32, #tpu.memory_space<vmem>>, vector<8x32xf32>
      tpu.vector_store %arg13[%c0_55, %c0_56], %106 {strides = array<i32>} : memref<8x32xf32, #tpu.memory_space<vmem>>, vector<8x32xf32>,
    } else {
    }
    %c0_47 = arith.constant 0 : index
    %c0_48 = arith.constant 0 : index
    %98 = vector.load %arg13[%c0_47, %c0_48] : memref<8x32xf32, #tpu.memory_space<vmem>>, vector<8x32xf32>
    %99 = arith.addf %98, %94 : vector<8x32xf32>
    %c0_49 = arith.constant 0 : index
    %c0_50 = arith.constant 0 : index
    %100 = vector.load %arg13[%c0_49, %c0_50] : memref<8x32xf32, #tpu.memory_space<vmem>>, vector<8x32xf32>
    tpu.vector_store %arg13[%c0_49, %c0_50], %99 {strides = array<i32>} : memref<8x32xf32, #tpu.memory_space<vmem>>, vector<8x32xf32>,
    %c0_i32_51 = arith.constant 0 : i32
    %101 = arith.cmpi eq, %arg2, %c0_i32_51 : i32
    %102 = arith.extui %101 : i1 to i32
    %c0_i32_52 = arith.constant 0 : i32
    %103 = arith.cmpi ne, %102, %c0_i32_52 : i32
    scf.if %103 {
      %c0_53 = arith.constant 0 : index
      %c0_54 = arith.constant 0 : index
      %104 = vector.load %arg13[%c0_53, %c0_54] : memref<8x32xf32, #tpu.memory_space<vmem>>, vector<8x32xf32>
      %c0_55 = arith.constant 0 : index
      %c0_56 = arith.constant 0 : index
      %c0_57 = arith.constant 0 : index
      %105 = vector.load %arg11[%c0_55, %c0_56, %c0_57] : memref<1x8x32xf32, #tpu.memory_space<vmem>>, vector<1x8x32xf32>
      %106 = vector.shape_cast %105 : vector<1x8x32xf32> to vector<8x32xf32>
      %107 = vector.shape_cast %104 : vector<8x32xf32> to vector<1x8x32xf32>
      tpu.vector_store %arg11[%c0_55, %c0_56, %c0_57], %107 {strides = array<i32>} : memref<1x8x32xf32, #tpu.memory_space<vmem>>, vector<1x8x32xf32>,
    } else {
    }
    return
  }
  func.func @transform_0(%arg0: i32, %arg1: i32, %arg2: i32) -> (i32, i32, i32) {
    %c0_i32 = arith.constant 0 : i32
    %c0_i32_0 = arith.constant 0 : i32
    return %arg0, %arg1, %c0_i32 : i32, i32, i32
  }
  func.func @transform_1(%arg0: i32, %arg1: i32, %arg2: i32) -> (i32, i32, i32) {
    %c0_i32 = arith.constant 0 : i32
    %c0_i32_0 = arith.constant 0 : i32
    %c0_i32_1 = arith.constant 0 : i32
    return %arg0, %c0_i32, %c0_i32_0 : i32, i32, i32
  }
  func.func @transform_2(%arg0: i32, %arg1: i32, %arg2: i32) -> (i32, i32, i32) {
    %c0_i32 = arith.constant 0 : i32
    %c0_i32_0 = arith.constant 0 : i32
    %c0_i32_1 = arith.constant 0 : i32
    %c0_i32_2 = arith.constant 0 : i32
    return %c0_i32, %c0_i32_0, %c0_i32_1 : i32, i32, i32
  }
  func.func @transform_3(%arg0: i32, %arg1: i32, %arg2: i32) -> (i32, i32, i32) {
    %c0_i32 = arith.constant 0 : i32
    %c0_i32_0 = arith.constant 0 : i32
    %c0_i32_1 = arith.constant 0 : i32
    %c0_i32_2 = arith.constant 0 : i32
    return %c0_i32, %c0_i32_0, %c0_i32_1 : i32, i32, i32
  }
  func.func @transform_4(%arg0: i32, %arg1: i32, %arg2: i32) -> (i32, i32, i32) {
    %c0_i32 = arith.constant 0 : i32
    %c0_i32_0 = arith.constant 0 : i32
    %c0_i32_1 = arith.constant 0 : i32
    %c0_i32_2 = arith.constant 0 : i32
    return %c0_i32, %c0_i32_0, %c0_i32_1 : i32, i32, i32
  }
  func.func @transform_5(%arg0: i32, %arg1: i32, %arg2: i32) -> (i32, i32, i32) {
    %c0_i32 = arith.constant 0 : i32
    %c0_i32_0 = arith.constant 0 : i32
    %c0_i32_1 = arith.constant 0 : i32
    %c0_i32_2 = arith.constant 0 : i32
    return %c0_i32, %c0_i32_0, %c0_i32_1 : i32, i32, i32
  }
  func.func @transform_6(%arg0: i32, %arg1: i32, %arg2: i32) -> (i32, i32, i32) {
    %c0_i32 = arith.constant 0 : i32
    %c0_i32_0 = arith.constant 0 : i32
    %c0_i32_1 = arith.constant 0 : i32
    %c0_i32_2 = arith.constant 0 : i32
    return %c0_i32, %c0_i32_0, %c0_i32_1 : i32, i32, i32
  }
  func.func @transform_7(%arg0: i32, %arg1: i32, %arg2: i32) -> (i32, i32) {
    %c0_i32 = arith.constant 0 : i32
    %c0_i32_0 = arith.constant 0 : i32
    %c0_i32_1 = arith.constant 0 : i32
    return %c0_i32, %c0_i32_0 : i32, i32
  }
  func.func @transform_8(%arg0: i32, %arg1: i32, %arg2: i32) -> (i32, i32, i32) {
    %c0_i32 = arith.constant 0 : i32
    %c0_i32_0 = arith.constant 0 : i32
    return %arg0, %arg1, %c0_i32 : i32, i32, i32
  }
  func.func @transform_9(%arg0: i32, %arg1: i32, %arg2: i32) -> (i32, i32, i32, i32) {
    %c0_i32 = arith.constant 0 : i32
    %c0_i32_0 = arith.constant 0 : i32
    return %arg0, %arg2, %arg1, %c0_i32 : i32, i32, i32, i32
  }
}

</mosaic_0001>

<llo_original>
// kernel: tpu_custom_call.1
$region0: #{tpu_custom_call.1}
  #allocation0 [shape = 'u32[]', space=smem, size = 0x4, offset = 0x4, fixed_abs, tag = 'smem constant byte address 0x4 - core index']
  #allocation1 [shape = 'u32[72,128]{1,0:T(1,128)}', space=vmem, size = 0x9000, scoped, tag = 'internal scratch']
  #allocation2 [shape = 'f32[8,32]{1,0:T(8,128)}', space=vmem, size = 0x1000, scoped, tag = 'scratch operand']
  %s0 = inlined_call_operand.hbm [shape: f32[2,8,32], index: 0, kind: input, shape index: {}]
  %s1 = inlined_call_operand.hbm [shape: f32[2,8,32], index: 1, kind: input, shape index: {}]
  %s2 = inlined_call_operand.hbm [shape: f32[1,32,32], index: 2, kind: input, shape index: {}]
  %s3 = inlined_call_operand.vmem [shape: f32[1,1,32], index: 3, kind: input, shape index: {}]
  %s4 = inlined_call_operand.hbm [shape: f32[1,32,64], index: 4, kind: input, shape index: {}]
  %s5 = inlined_call_operand.vmem [shape: f32[1,1,64], index: 5, kind: input, shape index: {}]
  %s6 = inlined_call_operand.hbm [shape: f32[1,32,32], index: 6, kind: input, shape index: {}]
  %s7 = inlined_call_operand.vmem [shape: f32[1,32], index: 7, kind: input, shape index: {}]
  %s8 = inlined_call_operand.hbm [shape: f32[2,8,32], index: 8, kind: output, shape index: {0}]
  %s9 = inlined_call_operand.hbm [shape: f32[2,4,8,8], index: 9, kind: output, shape index: {1}]
  %10 = xla_tuple %s8, %s9
  %s11 = sld [smem:[#allocation0]]
  $region101: #{tpu_custom_call.1} parent=0
    _
  %s13 = ssub.s32 1, %s11
  %s14 = scalar_select 0, %s13, %s11
  $region1: #{tpu_custom_call.1} parent=0
    #allocation3 [shape = 'u8[8192]{0}', space=vmem, size = 0x2000, scoped, tag = 'input window, operand 0']
    #allocation4 [shape = 's32[2]{0}', space=sflag, size = 0x8, scoped, tag = 'scoped memory for tpu_custom_call.1']
    #allocation5 [shape = 's32[2]{0}', space=sflag, size = 0x8, scoped, tag = 'scoped memory for tpu_custom_call.1']
    #allocation6 [shape = 'u8[8192]{0}', space=vmem, size = 0x2000, scoped, tag = 'input window, operand 1']
    #allocation7 [shape = 's32[2]{0}', space=sflag, size = 0x8, scoped, tag = 'scoped memory for tpu_custom_call.1']
    #allocation8 [shape = 'u8[16384]{0}', space=vmem, size = 0x4000, scoped, tag = 'input window, operand 2, single buffered']
    #allocation9 [shape = 'u8[16384]{0}', space=vmem, size = 0x4000, scoped, tag = 'input window, operand 4, single buffered']
    #allocation10 [shape = 's32[1]{0}', space=sflag, size = 0x4, scoped, tag = 'scoped memory for tpu_custom_call.1']
    #allocation11 [shape = 'u8[16384]{0}', space=vmem, size = 0x4000, scoped, tag = 'input window, operand 6, single buffered']
    #allocation12 [shape = 'u8[8192]{0}', space=vmem, size = 0x2000, scoped, tag = 'output window, operand 0']
    #allocation13 [shape = 'u8[32768]{0}', space=vmem, size = 0x8000, scoped, tag = 'output window, operand 1']
    #allocation14 [shape = 's32[2]{0}', space=sflag, size = 0x8, scoped, tag = 'scoped memory for tpu_custom_call.1']
    %15 = vsyncpa [#allocation4], 0
    %s16 = scalar_lea.sflag [#allocation4], 1
    %17 = vsyncpa %s16, 0
    %18 = vsyncpa [#allocation7], 0
    %s19 = scalar_lea.sflag [#allocation7], 1
    %20 = vsyncpa %s19, 0
    %21 = vsyncpa [#allocation10], 0
    %22 = vsyncpa [#allocation5], 0
    %s23 = scalar_lea.sflag [#allocation5], 1
    %24 = vsyncpa %s23, 0
    %25 = vsyncpa [#allocation14], 0
    %s26 = scalar_lea.sflag [#allocation14], 1
    %27 = vsyncpa %s26, 0
    loop: start=0, step=1, limit=4
    $region2: #{tpu_custom_call.1} parent=1 // loop_pre_header
      _
    $region3: #{tpu_custom_call.1} parent=1 // loop_header
      %s29 = sphi 0, %s33
      %p30 = scmp.ge.s32.totalorder %s29, 4
      %s36 = sphi 0, %s55
      %s37 = sphi 0, %s51
      %s38 = sphi 0, %s47
      %s39 = sphi 0, %s36
      %s40 = sphi 0, %s37
      %s41 = sphi 0, %s38
      %s42 = sphi 0, %s39
      %s43 = sphi 0, %s40
      %s44 = sphi 0, %s41
      %s60 = sphi 0, %s62
      %s63 = sphi 0, %s60
      %s64 = sphi 0, %s63
      %s80 = sphi 0, %s64
      %s86 = sphi 0, %s88
      %s89 = sphi 0, %s86
      %s90 = sphi 0, %s89
      %s106 = sphi 0, %s90
      %s110 = sphi 0, %s110
      %s112 = sphi 0, %s110
      %s113 = sphi 0, %s112
      %s127 = sphi 0, %s113
      %s131 = sphi 0, %s131
      %s133 = sphi 0, %s131
      %s134 = sphi 0, %s133
      %s148 = sphi 0, %s134
      %s152 = sphi 0, %s152
      %s154 = sphi 0, %s152
      %s155 = sphi 0, %s154
      %s169 = sphi 0, %s155
      %s173 = sphi 0, %s173
      %s175 = sphi 0, %s173
      %s176 = sphi 0, %s175
      %s190 = sphi 0, %s176
      %s194 = sphi 0, %s194
      %s196 = sphi 0, %s194
      %s197 = sphi 0, %s196
      %s211 = sphi 0, %s197
      %s215 = sphi 0, %s215
      %s217 = sphi 0, %s215
      %s218 = sphi 0, %s217
      %s232 = sphi 0, %s218
      %s240 = sphi 0, %s242
      %s243 = sphi 0, %s240
      %s244 = sphi 0, %s243
      %s260 = sphi 0, %s244
      %s270 = sphi 0, %s272
      %s273 = sphi 0, %s270
      %s274 = sphi 0, %s273
      %s290 = sphi 0, %s274
    $region4: #{tpu_custom_call.1} parent=1 // loop_header_branch
      %32 = sbr.rel (%p30) target = $region8
    $region5: #{tpu_custom_call.1} parent=1 // loop_body
      %s34 = ssub.s32 %s29, 1
      %s35 = ssub.s32 %s29, 2
      %s45 = sadd.s32 1, %s38
      %p46 = scmp.ge.s32.totalorder %s45, 1
      %s47 = scalar_select %p46, 0, %s45
      %s48 = sadd.s32 1, %s37
      %s49 = scalar_select %p46, %s48, %s37
      %p50 = scmp.ge.s32.totalorder %s49, 1
      %s51 = scalar_select %p50, 0, %s49
      %s52 = sadd.s32 1, %s36
      %s53 = scalar_select %p50, %s52, %s36
      %p54 = scmp.ge.s32.totalorder %s53, 2
      %s55 = scalar_select %p54, 0, %s53
      %s56 = ssub.s32 %s36, %s55
      %s57 = ssub.s32 %s37, %s51
      %s58 = sor.u32 %s56, %s57
      %p59 = scmp.eq.s32.totalorder %s58, 0
      %s61 = sadd.s32 %s60, 1
      %s62 = scalar_select %p59, %s60, %s61
      %p65 = pneg %p59
      %p66 = scmp.eq.s32.totalorder %s29, 1
      %p67 = por %p65, %p66
      %p68 = scmp.ne.s32.totalorder %s60, %s63
      %p69 = scmp.eq.s32.totalorder %s29, 0
      %p70 = por %p68, %p69
      %p71 = scmp.ne.s32.totalorder %s60, %s63
      %p72 = scmp.eq.s32.totalorder %s34, 1
      %p73 = por %p71, %p72
      %p74 = scmp.ne.s32.totalorder %s63, %s64
      %p75 = scmp.eq.s32.totalorder %s34, 0
      %p76 = por %p74, %p75
      %p77 = scmp.ne.s32.totalorder %s63, %s64
      %p78 = scmp.eq.s32.totalorder %s35, 1
      %p79 = por %p77, %p78
      %p81 = scmp.ne.s32.totalorder %s64, %s80
      %p82 = scmp.eq.s32.totalorder %s35, 0
      %p83 = por %p81, %p82
      %s84 = ssub.s32 %s36, %s55
      %p85 = scmp.eq.s32.totalorder %s84, 0
      %s87 = sadd.s32 %s86, 1
      %s88 = scalar_select %p85, %s86, %s87
      %p91 = pneg %p85
      %p92 = scmp.eq.s32.totalorder %s29, 1
      %p93 = por %p91, %p92
      %p94 = scmp.ne.s32.totalorder %s86, %s89
      %p95 = scmp.eq.s32.totalorder %s29, 0
      %p96 = por %p94, %p95
      %p97 = scmp.ne.s32.totalorder %s86, %s89
      %p98 = scmp.eq.s32.totalorder %s34, 1
      %p99 = por %p97, %p98
      %p100 = scmp.ne.s32.totalorder %s89, %s90
      %p101 = scmp.eq.s32.totalorder %s34, 0
      %p102 = por %p100, %p101
      %p103 = scmp.ne.s32.totalorder %s89, %s90
      %p104 = scmp.eq.s32.totalorder %s35, 1
      %p105 = por %p103, %p104
      %p107 = scmp.ne.s32.totalorder %s90, %s106
      %p108 = scmp.eq.s32.totalorder %s35, 0
      %p109 = por %p107, %p108
      %s111 = sadd.s32 %s110, 1
      %p114 = scmp.eq.s32.totalorder %s29, 1
      %p115 = scmp.ne.s32.totalorder %s110, %s112
      %p116 = scmp.eq.s32.totalorder %s29, 0
      %p117 = por %p115, %p116
      %p118 = scmp.ne.s32.totalorder %s110, %s112
      %p119 = scmp.eq.s32.totalorder %s34, 1
      %p120 = por %p118, %p119
      %p121 = scmp.ne.s32.totalorder %s112, %s113
      %p122 = scmp.eq.s32.totalorder %s34, 0
      %p123 = por %p121, %p122
      %p124 = scmp.ne.s32.totalorder %s112, %s113
      %p125 = scmp.eq.s32.totalorder %s35, 1
      %p126 = por %p124, %p125
      %p128 = scmp.ne.s32.totalorder %s113, %s127
      %p129 = scmp.eq.s32.totalorder %s35, 0
      %p130 = por %p128, %p129
      %s132 = sadd.s32 %s131, 1
      %p135 = scmp.eq.s32.totalorder %s29, 1
      %p136 = scmp.ne.s32.totalorder %s131, %s133
      %p137 = scmp.eq.s32.totalorder %s29, 0
      %p138 = por %p136, %p137
      %p139 = scmp.ne.s32.totalorder %s131, %s133
      %p140 = scmp.eq.s32.totalorder %s34, 1
      %p141 = por %p139, %p140
      %p142 = scmp.ne.s32.totalorder %s133, %s134
      %p143 = scmp.eq.s32.totalorder %s34, 0
      %p144 = por %p142, %p143
      %p145 = scmp.ne.s32.totalorder %s133, %s134
      %p146 = scmp.eq.s32.totalorder %s35, 1
      %p147 = por %p145, %p146
      %p149 = scmp.ne.s32.totalorder %s134, %s148
      %p150 = scmp.eq.s32.totalorder %s35, 0
      %p151 = por %p149, %p150
      %s153 = sadd.s32 %s152, 1
      %p156 = scmp.eq.s32.totalorder %s29, 1
      %p157 = scmp.ne.s32.totalorder %s152, %s154
      %p158 = scmp.eq.s32.totalorder %s29, 0
      %p159 = por %p157, %p158
      %p160 = scmp.ne.s32.totalorder %s152, %s154
      %p161 = scmp.eq.s32.totalorder %s34, 1
      %p162 = por %p160, %p161
      %p163 = scmp.ne.s32.totalorder %s154, %s155
      %p164 = scmp.eq.s32.totalorder %s34, 0
      %p165 = por %p163, %p164
      %p166 = scmp.ne.s32.totalorder %s154, %s155
      %p167 = scmp.eq.s32.totalorder %s35, 1
      %p168 = por %p166, %p167
      %p170 = scmp.ne.s32.totalorder %s155, %s169
      %p171 = scmp.eq.s32.totalorder %s35, 0
      %p172 = por %p170, %p171
      %s174 = sadd.s32 %s173, 1
      %p177 = scmp.eq.s32.totalorder %s29, 1
      %p178 = scmp.ne.s32.totalorder %s173, %s175
      %p179 = scmp.eq.s32.totalorder %s29, 0
      %p180 = por %p178, %p179
      %p181 = scmp.ne.s32.totalorder %s173, %s175
      %p182 = scmp.eq.s32.totalorder %s34, 1
      %p183 = por %p181, %p182
      %p184 = scmp.ne.s32.totalorder %s175, %s176
      %p185 = scmp.eq.s32.totalorder %s34, 0
      %p186 = por %p184, %p185
      %p187 = scmp.ne.s32.totalorder %s175, %s176
      %p188 = scmp.eq.s32.totalorder %s35, 1
      %p189 = por %p187, %p188
      %p191 = scmp.ne.s32.totalorder %s176, %s190
      %p192 = scmp.eq.s32.totalorder %s35, 0
      %p193 = por %p191, %p192
      %s195 = sadd.s32 %s194, 1
      %p198 = scmp.eq.s32.totalorder %s29, 1
      %p199 = scmp.ne.s32.totalorder %s194, %s196
      %p200 = scmp.eq.s32.totalorder %s29, 0
      %p201 = por %p199, %p200
      %p202 = scmp.ne.s32.totalorder %s194, %s196
      %p203 = scmp.eq.s32.totalorder %s34, 1
      %p204 = por %p202, %p203
      %p205 = scmp.ne.s32.totalorder %s196, %s197
      %p206 = scmp.eq.s32.totalorder %s34, 0
      %p207 = por %p205, %p206
      %p208 = scmp.ne.s32.totalorder %s196, %s197
      %p209 = scmp.eq.s32.totalorder %s35, 1
      %p210 = por %p208, %p209
      %p212 = scmp.ne.s32.totalorder %s197, %s211
      %p213 = scmp.eq.s32.totalorder %s35, 0
      %p214 = por %p212, %p213
      %s216 = sadd.s32 %s215, 1
      %p219 = scmp.eq.s32.totalorder %s29, 1
      %p220 = scmp.ne.s32.totalorder %s215, %s217
      %p221 = scmp.eq.s32.totalorder %s29, 0
      %p222 = por %p220, %p221
      %p223 = scmp.ne.s32.totalorder %s215, %s217
      %p224 = scmp.eq.s32.totalorder %s34, 1
      %p225 = por %p223, %p224
      %p226 = scmp.ne.s32.totalorder %s217, %s218
      %p227 = scmp.eq.s32.totalorder %s34, 0
      %p228 = por %p226, %p227
      %p229 = scmp.ne.s32.totalorder %s217, %s218
      %p230 = scmp.eq.s32.totalorder %s35, 1
      %p231 = por %p229, %p230
      %p233 = scmp.ne.s32.totalorder %s218, %s232
      %p234 = scmp.eq.s32.totalorder %s35, 0
      %p235 = por %p233, %p234
      %s236 = ssub.s32 %s36, %s55
      %s237 = ssub.s32 %s37, %s51
      %s238 = sor.u32 %s236, %s237
      %p239 = scmp.eq.s32.totalorder %s238, 0
      %s241 = sadd.s32 %s240, 1
      %s242 = scalar_select %p239, %s240, %s241
      %p245 = pneg %p239
      %p246 = scmp.eq.s32.totalorder %s29, 1
      %p247 = por %p245, %p246
      %p248 = scmp.ne.s32.totalorder %s240, %s243
      %p249 = scmp.eq.s32.totalorder %s29, 0
      %p250 = por %p248, %p249
      %p251 = scmp.ne.s32.totalorder %s240, %s243
      %p252 = scmp.eq.s32.totalorder %s34, 1
      %p253 = por %p251, %p252
      %p254 = scmp.ne.s32.totalorder %s243, %s244
      %p255 = scmp.eq.s32.totalorder %s34, 0
      %p256 = por %p254, %p255
      %p257 = scmp.ne.s32.totalorder %s243, %s244
      %p258 = scmp.eq.s32.totalorder %s35, 1
      %p259 = por %p257, %p258
      %p261 = scmp.ne.s32.totalorder %s244, %s260
      %p262 = scmp.eq.s32.totalorder %s35, 0
      %p263 = por %p261, %p262
      %s264 = ssub.s32 %s36, %s55
      %s265 = ssub.s32 %s38, %s47
      %s266 = sor.u32 %s264, %s265
      %s267 = ssub.s32 %s37, %s51
      %s268 = sor.u32 %s266, %s267
      %p269 = scmp.eq.s32.totalorder %s268, 0
      %s271 = sadd.s32 %s270, 1
      %s272 = scalar_select %p269, %s270, %s271
      %p275 = pneg %p269
      %p276 = scmp.eq.s32.totalorder %s29, 1
      %p277 = por %p275, %p276
      %p278 = scmp.ne.s32.totalorder %s270, %s273
      %p279 = scmp.eq.s32.totalorder %s29, 0
      %p280 = por %p278, %p279
      %p281 = scmp.ne.s32.totalorder %s270, %s273
      %p282 = scmp.eq.s32.totalorder %s34, 1
      %p283 = por %p281, %p282
      %p284 = scmp.ne.s32.totalorder %s273, %s274
      %p285 = scmp.eq.s32.totalorder %s34, 0
      %p286 = por %p284, %p285
      %p287 = scmp.ne.s32.totalorder %s273, %s274
      %p288 = scmp.eq.s32.totalorder %s35, 1
      %p289 = por %p287, %p288
      %p291 = scmp.ne.s32.totalorder %s274, %s290
      %p292 = scmp.eq.s32.totalorder %s35, 0
      %p293 = por %p291, %p292
      %p294 = scmp.le.s32.totalorder 1, %s29
      %p295 = scmp.lt.s32.totalorder %s29, 3
      %p296 = pnand %p294, %p295
      %p297 = pneg %p296
      // Predicated region
      $region9: #{tpu_custom_call.1} parent=5 // pred_check
        _
      $region10: #{tpu_custom_call.1} parent=5 // pred_check_branch
        %299 = sbr.rel (%p296) target = $region12
      $region11: #{tpu_custom_call.1} parent=5 // pred_region
        %s300 = ssub.s32 %s29, 1
        // Predicated region
        $region13: #{tpu_custom_call.1} parent=11 // pred_check
          %p301 = pneg %p123
        $region14: #{tpu_custom_call.1} parent=11 // pred_check_branch
          %303 = sbr.rel (%p301) target = $region16
        $region15: #{tpu_custom_call.1} parent=11 // pred_region
          %305 = vsyncadd [#allocation7], 0
          %s306 = sshll.u32 %s2, 4
          %s307 = int_to_ptr.hbm [resolvable:$true] %s306
          %s308 = sshll.u32 [#allocation8], 4
          %s309 = int_to_ptr.vmem [resolvable:$true] %s308
          %314 = dma.hbm_to_vmem [thread:$0]  %s307, 512, %s309, [#allocation7], 128, 128, 8
        $region16: #{tpu_custom_call.1} parent=11 // pred_fallthru
          _
        // Predicated region
        $region17: #{tpu_custom_call.1} parent=11 // pred_check
          %p315 = pneg %p144
        $region18: #{tpu_custom_call.1} parent=11 // pred_check_branch
          %317 = sbr.rel (%p315) target = $region20
        $region19: #{tpu_custom_call.1} parent=11 // pred_region
          _
        $region20: #{tpu_custom_call.1} parent=11 // pred_fallthru
          _
        // Predicated region
        $region21: #{tpu_custom_call.1} parent=11 // pred_check
          %p318 = pneg %p165
        $region22: #{tpu_custom_call.1} parent=11 // pred_check_branch
          %320 = sbr.rel (%p318) target = $region24
        $region23: #{tpu_custom_call.1} parent=11 // pred_region
          %322 = vsyncadd [#allocation10], 0
          %s323 = sshll.u32 %s4, 4
          %s324 = int_to_ptr.hbm [resolvable:$true] %s323
          %s325 = sshll.u32 [#allocation9], 4
          %s326 = int_to_ptr.vmem [resolvable:$true] %s325
          %331 = dma.hbm_to_vmem [thread:$0]  %s324, 512, %s326, [#allocation10], 128, 128, 8
        $region24: #{tpu_custom_call.1} parent=11 // pred_fallthru
          _
        // Predicated region
        $region25: #{tpu_custom_call.1} parent=11 // pred_check
          %p332 = pneg %p186
        $region26: #{tpu_custom_call.1} parent=11 // pred_check_branch
          %334 = sbr.rel (%p332) target = $region28
        $region27: #{tpu_custom_call.1} parent=11 // pred_region
          _
        $region28: #{tpu_custom_call.1} parent=11 // pred_fallthru
          _
        // Predicated region
        $region29: #{tpu_custom_call.1} parent=11 // pred_check
          %p335 = pneg %p207
        $region30: #{tpu_custom_call.1} parent=11 // pred_check_branch
          %337 = sbr.rel (%p335) target = $region32
        $region31: #{tpu_custom_call.1} parent=11 // pred_region
          %339 = vsyncadd [#allocation10], 0
          %s340 = sshll.u32 %s6, 4
          %s341 = int_to_ptr.hbm [resolvable:$true] %s340
          %s342 = sshll.u32 [#allocation11], 4
          %s343 = int_to_ptr.vmem [resolvable:$true] %s342
          %348 = dma.hbm_to_vmem [thread:$0]  %s341, 512, %s343, [#allocation10], 128, 128, 8
        $region32: #{tpu_custom_call.1} parent=11 // pred_fallthru
          _
        // Predicated region
        $region33: #{tpu_custom_call.1} parent=11 // pred_check
          %p349 = pneg %p228
        $region34: #{tpu_custom_call.1} parent=11 // pred_check_branch
          %351 = sbr.rel (%p349) target = $region36
        $region35: #{tpu_custom_call.1} parent=11 // pred_region
          _
        $region36: #{tpu_custom_call.1} parent=11 // pred_fallthru
          _
      $region12: #{tpu_custom_call.1} parent=5 // pred_fallthru
        _
      %p352 = scmp.lt.s32.totalorder %s29, 2
      // Predicated region
      $region37: #{tpu_custom_call.1} parent=5 // pred_check
        %p353 = pneg %p352
      $region38: #{tpu_custom_call.1} parent=5 // pred_check_branch
        %355 = sbr.rel (%p353) target = $region40
      $region39: #{tpu_custom_call.1} parent=5 // pred_region
        // Predicated region
        $region41: #{tpu_custom_call.1} parent=39 // pred_check
          %p356 = pneg %p70
        $region42: #{tpu_custom_call.1} parent=39 // pred_check_branch
          %358 = sbr.rel (%p356) target = $region44
        $region43: #{tpu_custom_call.1} parent=39 // pred_region
          %s359 = sand.u32 %s60, 1
          %s360 = scalar_lea.sflag [#allocation4], %s359
          %s361 = sand.u32 %s60, 1
          %s362 = smul.addr %s361, 8
          %s363 = scalar_lea.vmem [#allocation3], %s362
          %365 = vsyncadd %s360, 0
          %s366 = sadd.s32 %s37, %s36
          %s367 = smul.addr %s366, 8
          %s368 = scalar_lea.hbm %s0, %s367
          %s370 = sshll.u32 %s368, 4
          %s371 = int_to_ptr.hbm [resolvable:$true] %s370
          %s372 = sshll.u32 %s363, 4
          %s373 = int_to_ptr.vmem [resolvable:$true] %s372
          %375 = dma.hbm_to_vmem [thread:$0]  %s371, 128, %s373, %s360
        $region44: #{tpu_custom_call.1} parent=39 // pred_fallthru
          _
        // Predicated region
        $region45: #{tpu_custom_call.1} parent=39 // pred_check
          %p376 = pneg %p96
        $region46: #{tpu_custom_call.1} parent=39 // pred_check_branch
          %378 = sbr.rel (%p376) target = $region48
        $region47: #{tpu_custom_call.1} parent=39 // pred_region
          %s379 = sand.u32 %s29, 1
          %s380 = scalar_lea.sflag [#allocation7], %s379
          %s381 = sand.u32 %s86, 1
          %s382 = smul.addr %s381, 8
          %s383 = scalar_lea.vmem [#allocation6], %s382
          %385 = vsyncadd %s380, 0
          %s386 = smul.addr %s36, 8
          %s387 = scalar_lea.hbm %s1, %s386
          %s389 = sshll.u32 %s387, 4
          %s390 = int_to_ptr.hbm [resolvable:$true] %s389
          %s391 = sshll.u32 %s383, 4
          %s392 = int_to_ptr.vmem [resolvable:$true] %s391
          %394 = dma.hbm_to_vmem [thread:$0]  %s390, 128, %s392, %s380
        $region48: #{tpu_custom_call.1} parent=39 // pred_fallthru
          _
      $region40: #{tpu_custom_call.1} parent=5 // pred_fallthru
        _
      %p395 = scmp.le.s32.totalorder 1, %s29
      %p396 = scmp.lt.s32.totalorder %s29, 3
      %p397 = pnand %p395, %p396
      %p398 = pneg %p397
      // Predicated region
      $region49: #{tpu_custom_call.1} parent=5 // pred_check
        _
      $region50: #{tpu_custom_call.1} parent=5 // pred_check_branch
        %400 = sbr.rel (%p397) target = $region52
      $region51: #{tpu_custom_call.1} parent=5 // pred_region
        %s401 = ssub.s32 %s29, 1
        %s402 = sand.u32 %s63, 1
        %s403 = scalar_lea.sflag [#allocation4], %s402
        %s404 = sand.u32 %s63, 1
        %s405 = smul.addr %s404, 8
        %s406 = scalar_lea.vmem [#allocation3], %s405
        // Predicated region
        $region53: #{tpu_custom_call.1} parent=51 // pred_check
          %p407 = pneg %p76
        $region54: #{tpu_custom_call.1} parent=51 // pred_check_branch
          %409 = sbr.rel (%p407) target = $region56
        $region55: #{tpu_custom_call.1} parent=51 // pred_region
          %411 = dma.done %s403, 128
        $region56: #{tpu_custom_call.1} parent=51 // pred_fallthru
          _
        %s412 = sand.u32 %s34, 1
        %s413 = scalar_lea.sflag [#allocation7], %s412
        %s414 = sand.u32 %s89, 1
        %s415 = smul.addr %s414, 8
        %s416 = scalar_lea.vmem [#allocation6], %s415
        // Predicated region
        $region57: #{tpu_custom_call.1} parent=51 // pred_check
          %p417 = pneg %p102
        $region58: #{tpu_custom_call.1} parent=51 // pred_check_branch
          %419 = sbr.rel (%p417) target = $region60
        $region59: #{tpu_custom_call.1} parent=51 // pred_region
          %421 = dma.done %s413, 128
        $region60: #{tpu_custom_call.1} parent=51 // pred_fallthru
          _
        // Predicated region
        $region61: #{tpu_custom_call.1} parent=51 // pred_check
          %p422 = pneg %p123
        $region62: #{tpu_custom_call.1} parent=51 // pred_check_branch
          %424 = sbr.rel (%p422) target = $region64
        $region63: #{tpu_custom_call.1} parent=51 // pred_region
          %426 = dma.done [#allocation7], 512
        $region64: #{tpu_custom_call.1} parent=51 // pred_fallthru
          _
        // Predicated region
        $region65: #{tpu_custom_call.1} parent=51 // pred_check
          %p427 = pneg %p165
        $region66: #{tpu_custom_call.1} parent=51 // pred_check_branch
          %429 = sbr.rel (%p427) target = $region68
        $region67: #{tpu_custom_call.1} parent=51 // pred_region
          %431 = dma.done [#allocation10], 512
        $region68: #{tpu_custom_call.1} parent=51 // pred_fallthru
          _
        // Predicated region
        $region69: #{tpu_custom_call.1} parent=51 // pred_check
          %p432 = pneg %p207
        $region70: #{tpu_custom_call.1} parent=51 // pred_check_branch
          %434 = sbr.rel (%p432) target = $region72
        $region71: #{tpu_custom_call.1} parent=51 // pred_region
          %436 = dma.done [#allocation10], 512
        $region72: #{tpu_custom_call.1} parent=51 // pred_fallthru
          _
        %s437 = sand.u32 %s63, 1
        %s438 = scalar_lea.sflag [#allocation4], %s437
        %s439 = sand.u32 %s63, 1
        %s440 = smul.addr %s439, 8
        %s441 = scalar_lea.vmem [#allocation3], %s440
        %p442 = pneg %p76
        %p443 = pneg %p73
        %s444 = sand.u32 %s34, 1
        %s445 = scalar_lea.sflag [#allocation7], %s444
        %s446 = sand.u32 %s89, 1
        %s447 = smul.addr %s446, 8
        %s448 = scalar_lea.vmem [#allocation6], %s447
        %p449 = pneg %p102
        %p450 = pneg %p99
        %p451 = pneg %p123
        %p452 = pneg %p120
        %p453 = pneg %p144
        %p454 = pneg %p141
        %p455 = pneg %p165
        %p456 = pneg %p162
        %p457 = pneg %p186
        %p458 = pneg %p183
        %p459 = pneg %p207
        %p460 = pneg %p204
        %p461 = pneg %p228
        %p462 = pneg %p225
        %p463 = pneg %p256
        %p464 = pneg %p253
        %s465 = sand.u32 %s243, 1
        %s466 = scalar_lea.sflag [#allocation5], %s465
        %s467 = sand.u32 %s243, 1
        %s468 = smul.addr %s467, 8
        %s469 = scalar_lea.vmem [#allocation12], %s468
        %p470 = pneg %p286
        %p471 = pneg %p283
        %s472 = sand.u32 %s273, 1
        %s473 = scalar_lea.sflag [#allocation14], %s472
        %s474 = sand.u32 %s273, 1
        %s475 = smul.addr %s474, 32
        %s476 = scalar_lea.vmem [#allocation13], %s475
        %s477 = smul.u32 4, %s41
        %v478 = vld [vmem:[%s406] sm:$0xff]
        %v479 = vld [vmem:[%s416] sm:$0xff]
        %s480 = smul.u32 %s41, 32
        %s481 = scalar_lea.vmem [#allocation8], %s480
        %v482 = vld [vmem:[%s481] sm:$0xff]
        %v483 = vld [vmem:[%s481 + $0x8] sm:$0xff]
        %v484 = vld [vmem:[%s481 + $0x10] sm:$0xff]
        %v485 = vld [vmem:[%s481 + $0x18] sm:$0xff]
        %s486 = scalar_lea.vmem %s3, %s41
        %v487 = vld [vmem:[%s486] sm:$0x1]
        %v489 = vperm.slane %v487, 0
        %vm491 = vcmask 261120
        %v493 = vsel %vm491, %v478, 0
        %495 = vmatpush.msra.mxu0 0.0
        %496 = vmatpush.msra.mxu0 0.0
        %497 = vmatpush.msra.mxu0 0.0
        %498 = vmatpush.msra.mxu0 0.0
        %499 = vmatpush.msra.mxu0 0.0
        %500 = vmatpush.msra.mxu0 0.0
        %501 = vmatpush.msra.mxu0 0.0
        %502 = vmatpush.msra.mxu0 0.0
        %503 = vmatpush.msra.mxu0 0.0
        %504 = vmatpush.msra.mxu0 0.0
        %505 = vmatpush.msra.mxu0 0.0
        %506 = vmatpush.msra.mxu0 0.0
        %507 = vmatpush.msra.mxu0 %v485
        %508 = vmatpush.msra.mxu0 %v484
        %509 = vmatpush.msra.mxu0 %v483
        %510 = vmatpush.msra.mxu0 %v482
        %511 = vmatmul.f32.gmra.mxu0 %v493
        %v512 = vpop.f32.mrf.mxu0
        %v513 = vadd.f32 %v489, %v512
        %514 = vdwg.mxu0
        %s515 = scalar_lea.vmem [#allocation9], %s480
        %v516 = vld [vmem:[%s515] sm:$0xff]
        %v517 = vld [vmem:[%s515 + $0x8] sm:$0xff]
        %v518 = vld [vmem:[%s515 + $0x10] sm:$0xff]
        %v519 = vld [vmem:[%s515 + $0x18] sm:$0xff]
        %s520 = scalar_lea.vmem %s5, %s41
        %v521 = vld [vmem:[%s520] sm:$0x1]
        %v523 = vperm.slane %v521, 0
        %v526 = vsel %vm491, %v479, 0
        %528 = vmatpush.msra.mxu0 0.0
        %529 = vmatpush.msra.mxu0 0.0
        %530 = vmatpush.msra.mxu0 0.0
        %531 = vmatpush.msra.mxu0 0.0
        %532 = vmatpush.msra.mxu0 0.0
        %533 = vmatpush.msra.mxu0 0.0
        %534 = vmatpush.msra.mxu0 0.0
        %535 = vmatpush.msra.mxu0 0.0
        %536 = vmatpush.msra.mxu0 0.0
        %537 = vmatpush.msra.mxu0 0.0
        %538 = vmatpush.msra.mxu0 0.0
        %539 = vmatpush.msra.mxu0 0.0
        %540 = vmatpush.msra.mxu0 %v519
        %541 = vmatpush.msra.mxu0 %v518
        %542 = vmatpush.msra.mxu0 %v517
        %543 = vmatpush.msra.mxu0 %v516
        %544 = vmatmul.f32.gmra.mxu0 %v526
        %v545 = vpop.f32.mrf.mxu0
        %v546 = vadd.f32 %v523, %v545
        %547 = vdwg.mxu0
        %vm548 = vcmask 64512
        %v550 = vsel %vm548, %v513, 0
        %v553 = vsel %vm548, %v546, 0
        %555 = vmatpush.xpose.msra.mxu0 0.0
        %556 = vmatpush.xpose.msra.mxu0 0.0
        %557 = vmatpush.xpose.msra.mxu0 0.0
        %558 = vmatpush.xpose.msra.mxu0 0.0
        %559 = vmatpush.xpose.msra.mxu0 0.0
        %560 = vmatpush.xpose.msra.mxu0 0.0
        %561 = vmatpush.xpose.msra.mxu0 0.0
        %562 = vmatpush.xpose.msra.mxu0 0.0
        %563 = vmatpush.xpose.msra.mxu0 0.0
        %564 = vmatpush.xpose.msra.mxu0 0.0
        %565 = vmatpush.xpose.msra.mxu0 0.0
        %566 = vmatpush.xpose.msra.mxu0 0.0
        %567 = vmatpush.xpose.msra.mxu0 0.0
        %568 = vmatpush.xpose.msra.mxu0 0.0
        %569 = vmatpush.xpose.msra.mxu0 0.0
        %570 = vmatpush.xpose.msra.mxu0 %v553
        %571 = vmatmul.f32.gmra.mxu0 %v550
        %v572 = vpop.f32.mrf.mxu0
        %v573 = vadd.f32 0.0, %v572
        %574 = vdwg.mxu0
        %v575 = vsel %vm548, %v573, -inf
        %576 = vmax.xlane.f32.xlu0 %v575
        %v577 = vpop.xlane.xlu0 %576
        %v578 = vsub.f32 %v573, %v577
        %v579 = vmul.f32 %v578, 1.442695
        %v580 = vpow.pop %v579
        %v581 = vsel %vm548, %v580, 0.0
        %582 = vadd.xlane.f32.xlu0 %v581
        %v583 = vpop.xlane.xlu0 %582
        %v584 = vrcp.pop %v583
        %v585 = vmul.f32 %v583, %v584
        %v586 = vsub.f32 1.0, %v585
        %v587 = vmul.f32 %v584, %v586
        %v588 = vadd.f32 %v584, %v587
        %vm589 = vweird.f32 %v583
        %vm590 = vweird.f32 %v584
        %vm591 = vmor %vm589, %vm590
        %v592 = vsel %vm591, %v584, %v588
        %v593 = vand.u32 2147483647, %v583
        %vm594 = vcmp.eq.f32.partialorder %v593, 8.507059e+37
        %v595 = vand.u32 %v583, 2147483648
        %v596 = vor.u32 1.1754944e-38, %v595
        %v597 = vsel %vm594, %v596, %v592
        %v598 = vmul.f32 %v580, %v597
        %599 = vst.msk [vmem:[%s476] sm:$0xff] %vm548, %v598
        %600 = vrot.lane.b32.xlu0 %v546, 96
        %v601 = vpop.permute.xlu0 %600
        %v604 = vsel %vm548, %v598, 0
        %606 = vmatpush.msra.mxu0 0.0
        %607 = vmatpush.msra.mxu0 0.0
        %608 = vmatpush.msra.mxu0 0.0
        %609 = vmatpush.msra.mxu0 0.0
        %610 = vmatpush.msra.mxu0 0.0
        %611 = vmatpush.msra.mxu0 0.0
        %612 = vmatpush.msra.mxu0 0.0
        %613 = vmatpush.msra.mxu0 0.0
        %614 = vmatpush.msra.mxu0 0.0
        %615 = vmatpush.msra.mxu0 0.0
        %616 = vmatpush.msra.mxu0 0.0
        %617 = vmatpush.msra.mxu0 0.0
        %618 = vmatpush.msra.mxu0 0.0
        %619 = vmatpush.msra.mxu0 0.0
        %620 = vmatpush.msra.mxu0 0.0
        %621 = vmatpush.msra.mxu0 %v601
        %622 = vmatmul.f32.gmra.mxu0 %v604
        %v623 = vpop.f32.mrf.mxu0
        %v624 = vadd.f32 0.0, %v623
        %625 = vdwg.mxu0
        %626 = vrot.lane.b32.xlu0 %v513, 120
        %v627 = vpop.permute.xlu0 %626
        %628 = vrot.lane.b32.xlu0 %v546, 120
        %v629 = vpop.permute.xlu0 %628
        %v630 = vsel %vm548, %v627, 0
        %v632 = vsel %vm548, %v629, 0
        %634 = vmatpush.xpose.msra.mxu0 0.0
        %635 = vmatpush.xpose.msra.mxu0 0.0
        %636 = vmatpush.xpose.msra.mxu0 0.0
        %637 = vmatpush.xpose.msra.mxu0 0.0
        %638 = vmatpush.xpose.msra.mxu0 0.0
        %639 = vmatpush.xpose.msra.mxu0 0.0
        %640 = vmatpush.xpose.msra.mxu0 0.0
        %641 = vmatpush.xpose.msra.mxu0 0.0
        %642 = vmatpush.xpose.msra.mxu0 0.0
        %643 = vmatpush.xpose.msra.mxu0 0.0
        %644 = vmatpush.xpose.msra.mxu0 0.0
        %645 = vmatpush.xpose.msra.mxu0 0.0
        %646 = vmatpush.xpose.msra.mxu0 0.0
        %647 = vmatpush.xpose.msra.mxu0 0.0
        %648 = vmatpush.xpose.msra.mxu0 0.0
        %649 = vmatpush.xpose.msra.mxu0 %v632
        %650 = vmatmul.f32.gmra.mxu0 %v630
        %v651 = vpop.f32.mrf.mxu0
        %v652 = vadd.f32 0.0, %v651
        %653 = vdwg.mxu0
        %v654 = vsel %vm548, %v652, -inf
        %655 = vmax.xlane.f32.xlu0 %v654
        %v656 = vpop.xlane.xlu0 %655
        %v657 = vsub.f32 %v652, %v656
        %v658 = vmul.f32 %v657, 1.442695
        %v659 = vpow.pop %v658
        %v660 = vsel %vm548, %v659, 0.0
        %661 = vadd.xlane.f32.xlu0 %v660
        %v662 = vpop.xlane.xlu0 %661
        %v663 = vrcp.pop %v662
        %v664 = vmul.f32 %v662, %v663
        %v665 = vsub.f32 1.0, %v664
        %v666 = vmul.f32 %v663, %v665
        %v667 = vadd.f32 %v663, %v666
        %vm668 = vweird.f32 %v662
        %vm669 = vweird.f32 %v663
        %vm670 = vmor %vm668, %vm669
        %v671 = vsel %vm670, %v663, %v667
        %v672 = vand.u32 2147483647, %v662
        %vm673 = vcmp.eq.f32.partialorder %v672, 8.507059e+37
        %v674 = vand.u32 %v662, 2147483648
        %v675 = vor.u32 1.1754944e-38, %v674
        %v676 = vsel %vm673, %v675, %v671
        %v677 = vmul.f32 %v659, %v676
        %s678 = scalar_lea.vmem %s476, 8 [#allocation13]
        %679 = vst.msk [vmem:[%s678] sm:$0xff] %vm548, %v677
        %680 = vrot.lane.b32.xlu0 %v546, 88
        %v681 = vpop.permute.xlu0 %680
        %v684 = vsel %vm548, %v677, 0
        %686 = vmatpush.msra.mxu0 0.0
        %687 = vmatpush.msra.mxu0 0.0
        %688 = vmatpush.msra.mxu0 0.0
        %689 = vmatpush.msra.mxu0 0.0
        %690 = vmatpush.msra.mxu0 0.0
        %691 = vmatpush.msra.mxu0 0.0
        %692 = vmatpush.msra.mxu0 0.0
        %693 = vmatpush.msra.mxu0 0.0
        %694 = vmatpush.msra.mxu0 0.0
        %695 = vmatpush.msra.mxu0 0.0
        %696 = vmatpush.msra.mxu0 0.0
        %697 = vmatpush.msra.mxu0 0.0
        %698 = vmatpush.msra.mxu0 0.0
        %699 = vmatpush.msra.mxu0 0.0
        %700 = vmatpush.msra.mxu0 0.0
        %701 = vmatpush.msra.mxu0 %v681
        %702 = vmatmul.f32.gmra.mxu0 %v684
        %v703 = vpop.f32.mrf.mxu0
        %v704 = vadd.f32 0.0, %v703
        %705 = vdwg.mxu0
        %706 = vrot.lane.b32.xlu0 %v513, 112
        %v707 = vpop.permute.xlu0 %706
        %708 = vrot.lane.b32.xlu0 %v546, 112
        %v709 = vpop.permute.xlu0 %708
        %v710 = vsel %vm548, %v707, 0
        %v712 = vsel %vm548, %v709, 0
        %714 = vmatpush.xpose.msra.mxu0 0.0
        %715 = vmatpush.xpose.msra.mxu0 0.0
        %716 = vmatpush.xpose.msra.mxu0 0.0
        %717 = vmatpush.xpose.msra.mxu0 0.0
        %718 = vmatpush.xpose.msra.mxu0 0.0
        %719 = vmatpush.xpose.msra.mxu0 0.0
        %720 = vmatpush.xpose.msra.mxu0 0.0
        %721 = vmatpush.xpose.msra.mxu0 0.0
        %722 = vmatpush.xpose.msra.mxu0 0.0
        %723 = vmatpush.xpose.msra.mxu0 0.0
        %724 = vmatpush.xpose.msra.mxu0 0.0
        %725 = vmatpush.xpose.msra.mxu0 0.0
        %726 = vmatpush.xpose.msra.mxu0 0.0
        %727 = vmatpush.xpose.msra.mxu0 0.0
        %728 = vmatpush.xpose.msra.mxu0 0.0
        %729 = vmatpush.xpose.msra.mxu0 %v712
        %730 = vmatmul.f32.gmra.mxu0 %v710
        %v731 = vpop.f32.mrf.mxu0
        %v732 = vadd.f32 0.0, %v731
        %733 = vdwg.mxu0
        %v734 = vsel %vm548, %v732, -inf
        %735 = vmax.xlane.f32.xlu0 %v734
        %v736 = vpop.xlane.xlu0 %735
        %v737 = vsub.f32 %v732, %v736
        %v738 = vmul.f32 %v737, 1.442695
        %v739 = vpow.pop %v738
        %v740 = vsel %vm548, %v739, 0.0
        %741 = vadd.xlane.f32.xlu0 %v740
        %v742 = vpop.xlane.xlu0 %741
        %v743 = vrcp.pop %v742
        %v744 = vmul.f32 %v742, %v743
        %v745 = vsub.f32 1.0, %v744
        %v746 = vmul.f32 %v743, %v745
        %v747 = vadd.f32 %v743, %v746
        %vm748 = vweird.f32 %v742
        %vm749 = vweird.f32 %v743
        %vm750 = vmor %vm748, %vm749
        %v751 = vsel %vm750, %v743, %v747
        %v752 = vand.u32 2147483647, %v742
        %vm753 = vcmp.eq.f32.partialorder %v752, 8.507059e+37
        %v754 = vand.u32 %v742, 2147483648
        %v755 = vor.u32 1.1754944e-38, %v754
        %v756 = vsel %vm753, %v755, %v751
        %v757 = vmul.f32 %v739, %v756
        %s758 = scalar_lea.vmem %s476, 16 [#allocation13]
        %759 = vst.msk [vmem:[%s758] sm:$0xff] %vm548, %v757
        %760 = vrot.lane.b32.xlu0 %v546, 80
        %v761 = vpop.permute.xlu0 %760
        %v764 = vsel %vm548, %v757, 0
        %766 = vmatpush.msra.mxu0 0.0
        %767 = vmatpush.msra.mxu0 0.0
        %768 = vmatpush.msra.mxu0 0.0
        %769 = vmatpush.msra.mxu0 0.0
        %770 = vmatpush.msra.mxu0 0.0
        %771 = vmatpush.msra.mxu0 0.0
        %772 = vmatpush.msra.mxu0 0.0
        %773 = vmatpush.msra.mxu0 0.0
        %774 = vmatpush.msra.mxu0 0.0
        %775 = vmatpush.msra.mxu0 0.0
        %776 = vmatpush.msra.mxu0 0.0
        %777 = vmatpush.msra.mxu0 0.0
        %778 = vmatpush.msra.mxu0 0.0
        %779 = vmatpush.msra.mxu0 0.0
        %780 = vmatpush.msra.mxu0 0.0
        %781 = vmatpush.msra.mxu0 %v761
        %782 = vmatmul.f32.gmra.mxu0 %v764
        %v783 = vpop.f32.mrf.mxu0
        %v784 = vadd.f32 0.0, %v783
        %785 = vdwg.mxu0
        %786 = vrot.lane.b32.xlu0 %v513, 104
        %v787 = vpop.permute.xlu0 %786
        %788 = vrot.lane.b32.xlu0 %v546, 104
        %v789 = vpop.permute.xlu0 %788
        %v790 = vsel %vm548, %v787, 0
        %v792 = vsel %vm548, %v789, 0
        %794 = vmatpush.xpose.msra.mxu0 0.0
        %795 = vmatpush.xpose.msra.mxu0 0.0
        %796 = vmatpush.xpose.msra.mxu0 0.0
        %797 = vmatpush.xpose.msra.mxu0 0.0
        %798 = vmatpush.xpose.msra.mxu0 0.0
        %799 = vmatpush.xpose.msra.mxu0 0.0
        %800 = vmatpush.xpose.msra.mxu0 0.0
        %801 = vmatpush.xpose.msra.mxu0 0.0
        %802 = vmatpush.xpose.msra.mxu0 0.0
        %803 = vmatpush.xpose.msra.mxu0 0.0
        %804 = vmatpush.xpose.msra.mxu0 0.0
        %805 = vmatpush.xpose.msra.mxu0 0.0
        %806 = vmatpush.xpose.msra.mxu0 0.0
        %807 = vmatpush.xpose.msra.mxu0 0.0
        %808 = vmatpush.xpose.msra.mxu0 0.0
        %809 = vmatpush.xpose.msra.mxu0 %v792
        %810 = vmatmul.f32.gmra.mxu0 %v790
        %v811 = vpop.f32.mrf.mxu0
        %v812 = vadd.f32 0.0, %v811
        %813 = vdwg.mxu0
        %v814 = vsel %vm548, %v812, -inf
        %815 = vmax.xlane.f32.xlu0 %v814
        %v816 = vpop.xlane.xlu0 %815
        %v817 = vsub.f32 %v812, %v816
        %v818 = vmul.f32 %v817, 1.442695
        %v819 = vpow.pop %v818
        %v820 = vsel %vm548, %v819, 0.0
        %821 = vadd.xlane.f32.xlu0 %v820
        %v822 = vpop.xlane.xlu0 %821
        %v823 = vrcp.pop %v822
        %v824 = vmul.f32 %v822, %v823
        %v825 = vsub.f32 1.0, %v824
        %v826 = vmul.f32 %v823, %v825
        %v827 = vadd.f32 %v823, %v826
        %vm828 = vweird.f32 %v822
        %vm829 = vweird.f32 %v823
        %vm830 = vmor %vm828, %vm829
        %v831 = vsel %vm830, %v823, %v827
        %v832 = vand.u32 2147483647, %v822
        %vm833 = vcmp.eq.f32.partialorder %v832, 8.507059e+37
        %v834 = vand.u32 %v822, 2147483648
        %v835 = vor.u32 1.1754944e-38, %v834
        %v836 = vsel %vm833, %v835, %v831
        %v837 = vmul.f32 %v819, %v836
        %s838 = scalar_lea.vmem %s476, 24 [#allocation13]
        %839 = vst.msk [vmem:[%s838] sm:$0xff] %vm548, %v837
        %840 = vrot.lane.b32.xlu0 %v546, 72
        %v841 = vpop.permute.xlu0 %840
        %v844 = vsel %vm548, %v837, 0
        %846 = vmatpush.msra.mxu0 0.0
        %847 = vmatpush.msra.mxu0 0.0
        %848 = vmatpush.msra.mxu0 0.0
        %849 = vmatpush.msra.mxu0 0.0
        %850 = vmatpush.msra.mxu0 0.0
        %851 = vmatpush.msra.mxu0 0.0
        %852 = vmatpush.msra.mxu0 0.0
        %853 = vmatpush.msra.mxu0 0.0
        %854 = vmatpush.msra.mxu0 0.0
        %855 = vmatpush.msra.mxu0 0.0
        %856 = vmatpush.msra.mxu0 0.0
        %857 = vmatpush.msra.mxu0 0.0
        %858 = vmatpush.msra.mxu0 0.0
        %859 = vmatpush.msra.mxu0 0.0
        %860 = vmatpush.msra.mxu0 0.0
        %861 = vmatpush.msra.mxu0 %v841
        %862 = vmatmul.f32.gmra.mxu0 %v844
        %v863 = vpop.f32.mrf.mxu0
        %v864 = vadd.f32 0.0, %v863
        %865 = vdwg.mxu0
        %867 = vrot.lane.b32.xlu0 %v704, 8
        %v868 = vpop.permute.xlu0 %867
        %871 = vrot.lane.b32.xlu0 %v784, 16
        %v872 = vpop.permute.xlu0 %871
        %875 = vrot.lane.b32.xlu0 %v864, 24
        %v876 = vpop.permute.xlu0 %875
        %v878 = vsel %vm548, %v624, %v868
        %vm879 = vcmask 130048
        %v880 = vsel %vm879, %v878, %v872
        %vm881 = vcmask 195584
        %v882 = vsel %vm881, %v880, %v876
        %s883 = scalar_lea.vmem [#allocation11], %s480
        %v884 = vld [vmem:[%s883] sm:$0xff]
        %v885 = vld [vmem:[%s883 + $0x8] sm:$0xff]
        %v886 = vld [vmem:[%s883 + $0x10] sm:$0xff]
        %v887 = vld [vmem:[%s883 + $0x18] sm:$0xff]
        %v889 = vsel %vm491, %v882, 0
        %891 = vmatpush.msra.mxu0 0.0
        %892 = vmatpush.msra.mxu0 0.0
        %893 = vmatpush.msra.mxu0 0.0
        %894 = vmatpush.msra.mxu0 0.0
        %895 = vmatpush.msra.mxu0 0.0
        %896 = vmatpush.msra.mxu0 0.0
        %897 = vmatpush.msra.mxu0 0.0
        %898 = vmatpush.msra.mxu0 0.0
        %899 = vmatpush.msra.mxu0 0.0
        %900 = vmatpush.msra.mxu0 0.0
        %901 = vmatpush.msra.mxu0 0.0
        %902 = vmatpush.msra.mxu0 0.0
        %903 = vmatpush.msra.mxu0 %v887
        %904 = vmatpush.msra.mxu0 %v886
        %905 = vmatpush.msra.mxu0 %v885
        %906 = vmatpush.msra.mxu0 %v884
        %907 = vmatmul.f32.gmra.mxu0 %v889
        %v908 = vpop.f32.mrf.mxu0
        %v909 = vadd.f32 0.0, %v908
        %910 = vdwg.mxu0
        %p911 = scmp.eq.s32.totalorder %s41, 0
        // Predicated region
        $region73: #{tpu_custom_call.1} parent=51 // pred_check
          %p912 = pneg %p911
        $region74: #{tpu_custom_call.1} parent=51 // pred_check_branch
          %914 = sbr.rel (%p912) target = $region76
        $region75: #{tpu_custom_call.1} parent=51 // pred_region
          %v915 = vld [vmem:[%s7] sm:$0x1]
          %v917 = vperm.slane %v915, 0
          %919 = vst.msk [vmem:[#allocation2] sm:$0xff] %vm491, %v917
        $region76: #{tpu_custom_call.1} parent=51 // pred_fallthru
          _
        %v920 = vld [vmem:[#allocation2] sm:$0xff]
        %v921 = vadd.f32 %v920, %v909
        %922 = vst.msk [vmem:[#allocation2] sm:$0xff] %vm491, %v921
        // Predicated region
        $region77: #{tpu_custom_call.1} parent=51 // pred_check
          %p923 = pneg %p911
        $region78: #{tpu_custom_call.1} parent=51 // pred_check_branch
          %925 = sbr.rel (%p923) target = $region80
        $region79: #{tpu_custom_call.1} parent=51 // pred_region
          %v926 = vld [vmem:[#allocation2] sm:$0xff]
          %927 = vst.msk [vmem:[%s469] sm:$0xff] %vm491, %v926
        $region80: #{tpu_custom_call.1} parent=51 // pred_fallthru
          _
        %s928 = sand.u32 %s243, 1
        %s929 = scalar_lea.sflag [#allocation5], %s928
        %s930 = sand.u32 %s243, 1
        %s931 = smul.addr %s930, 8
        %s932 = scalar_lea.vmem [#allocation12], %s931
        %s933 = sand.u32 %s273, 1
        %s934 = scalar_lea.sflag [#allocation14], %s933
        %s935 = sand.u32 %s273, 1
        %s936 = smul.addr %s935, 32
        %s937 = scalar_lea.vmem [#allocation13], %s936
        // Predicated region
        $region81: #{tpu_custom_call.1} parent=51 // pred_check
          %p938 = pneg %p253
        $region82: #{tpu_custom_call.1} parent=51 // pred_check_branch
          %940 = sbr.rel (%p938) target = $region84
        $region83: #{tpu_custom_call.1} parent=51 // pred_region
          %942 = vsyncadd %s929, 0
          %s943 = sadd.s32 %s40, %s39
          %s944 = smul.addr %s943, 8
          %s945 = scalar_lea.hbm %s8, %s944
          %s947 = sshll.u32 %s932, 4
          %s948 = int_to_ptr.vmem [resolvable:$true] %s947
          %s949 = sshll.u32 %s945, 4
          %s950 = int_to_ptr.hbm [resolvable:$true] %s949
          %952 = dma.vmem_to_hbm [thread:$0]  %s948, 128, %s950, %s929
        $region84: #{tpu_custom_call.1} parent=51 // pred_fallthru
          _
        // Predicated region
        $region85: #{tpu_custom_call.1} parent=51 // pred_check
          %p953 = pneg %p283
        $region86: #{tpu_custom_call.1} parent=51 // pred_check_branch
          %955 = sbr.rel (%p953) target = $region88
        $region87: #{tpu_custom_call.1} parent=51 // pred_region
          %s956 = smul.u32 4, %s41
          %958 = vsyncadd %s934, 0
          %s959 = sadd.s32 %s40, %s956
          %s960 = smul.addr %s39, 4
          %s961 = sadd.s32 %s959, %s960
          %s962 = smul.addr %s961, 8
          %s963 = scalar_lea.hbm %s9, %s962
          %s964 = sshll.u32 %s937, 4
          %s965 = int_to_ptr.vmem [resolvable:$true] %s964
          %s966 = sshll.u32 %s963, 4
          %s967 = int_to_ptr.hbm [resolvable:$true] %s966
          %972 = dma.vmem_to_hbm [thread:$0]  %s965, 512, %s967, %s934, 128, 128, 8
        $region88: #{tpu_custom_call.1} parent=51 // pred_fallthru
          _
      $region52: #{tpu_custom_call.1} parent=5 // pred_fallthru
        _
      %p973 = scmp.le.s32.totalorder 2, %s29
      // Predicated region
      $region89: #{tpu_custom_call.1} parent=5 // pred_check
        %p974 = pneg %p973
      $region90: #{tpu_custom_call.1} parent=5 // pred_check_branch
        %976 = sbr.rel (%p974) target = $region92
      $region91: #{tpu_custom_call.1} parent=5 // pred_region
        %s977 = ssub.s32 %s29, 2
        // Predicated region
        $region93: #{tpu_custom_call.1} parent=91 // pred_check
          %p978 = pneg %p259
        $region94: #{tpu_custom_call.1} parent=91 // pred_check_branch
          %980 = sbr.rel (%p978) target = $region96
        $region95: #{tpu_custom_call.1} parent=91 // pred_region
          %s981 = sand.u32 %s244, 1
          %s982 = scalar_lea.sflag [#allocation5], %s981
          %s983 = sand.u32 %s244, 1
          %s984 = smul.addr %s983, 8
          %s985 = scalar_lea.vmem [#allocation12], %s984
          %987 = dma.done %s982, 128
        $region96: #{tpu_custom_call.1} parent=91 // pred_fallthru
          _
        // Predicated region
        $region97: #{tpu_custom_call.1} parent=91 // pred_check
          %p988 = pneg %p289
        $region98: #{tpu_custom_call.1} parent=91 // pred_check_branch
          %990 = sbr.rel (%p988) target = $region100
        $region99: #{tpu_custom_call.1} parent=91 // pred_region
          %s991 = sand.u32 %s274, 1
          %s992 = scalar_lea.sflag [#allocation14], %s991
          %s993 = sand.u32 %s274, 1
          %s994 = smul.addr %s993, 32
          %s995 = scalar_lea.vmem [#allocation13], %s994
          %997 = dma.done %s992, 512
        $region100: #{tpu_custom_call.1} parent=91 // pred_fallthru
          _
      $region92: #{tpu_custom_call.1} parent=5 // pred_fallthru
        _
    $region6: #{tpu_custom_call.1} parent=1 // loop_footer
      %s33 = sadd.s32 1, %s29
    $region7: #{tpu_custom_call.1} parent=1 // loop_footer_branch
      %28 = sbr.rel target = $region3
    $region8: #{tpu_custom_call.1} parent=1 // loop_exit
      _
    %998 = vsyncpa [#allocation4], 1
    %s999 = scalar_lea.sflag [#allocation4], 1
    %1000 = vsyncpa %s999, 1
    %1001 = vsyncpa [#allocation7], 1
    %s1002 = scalar_lea.sflag [#allocation7], 1
    %1003 = vsyncpa %s1002, 1
    %1004 = vsyncpa [#allocation10], 1
    %1005 = vsyncpa [#allocation5], 1
    %s1006 = scalar_lea.sflag [#allocation5], 1
    %1007 = vsyncpa %s1006, 1
    %1008 = vsyncpa [#allocation14], 1
    %s1009 = scalar_lea.sflag [#allocation14], 1
    %1010 = vsyncpa %s1009, 1

</llo_original>
